<compile_context>
chip_gen: v7x
topology: tpu7x:2x2x1
jax: 0.10.0
libtpu: 0.0.40
codegen_flags: <defaults>
</compile_context>

<pallas_src>
import math

import jax
import jax.numpy as jnp
from jax.experimental import pallas as pl
from jax.experimental.pallas import tpu as pltpu

_LANE = 128
_SUBLANE_BY_ITEMSIZE = {4: 8, 2: 16, 1: 32}


def _dotproduct_kernel(x_ref, w_ref, o_ref):
    # x_ref: (tile_n, tile_f), w_ref: (1, tile_f) -> broadcast over the
    # row (sublane) axis, exactly matching torch.mul(input, weight).
    o_ref[...] = x_ref[...] * w_ref[...]


def dotproduct_forward(x: jax.Array, weight: jax.Array) -> jax.Array:
    """out = x * weight, weight of shape (1, F) broadcast over leading dims."""
    orig_shape = x.shape
    f = orig_shape[-1]
    assert weight.shape == (1, f), "weight must be (1, in_features)"
    weight = weight.astype(x.dtype)

    # Flatten leading dims -> (rows, F); pure layout plumbing.
    x2 = x.reshape(-1, f)
    rows, width = x2.shape
    w2 = weight

    # Lane packing: if F < 128 and rows divide evenly, view k rows as one
    # lane-dense row of k*F so stores are full-lane (unmasked) vst.
    pack = 1
    if width < _LANE and rows > 1:
        k_min = _LANE // math.gcd(width, _LANE)
        if k_min > 1 and rows % k_min == 0:
            pack = k_min
            while pack * 2 * width <= 1024 and rows % (pack * 2) == 0:
                pack *= 2
    if pack > 1:
        x2 = x2.reshape(rows // pack, pack * width)
        w2 = jnp.tile(weight, (1, pack))
        rows, width = x2.shape

    itemsize = jnp.dtype(x.dtype).itemsize
    sublane_min = _SUBLANE_BY_ITEMSIZE.get(itemsize, 8)

    # Lane tiling: only split F when it is a large multiple of 128
    # (block last dim must be divisible by 128 or equal the full dim).
    if width % _LANE == 0 and width > 2048:
        tile_f = 2048
    else:
        tile_f = width

    # Row tiling: biggest tile such that in+out, double-buffered, stay
    # within ~32 MiB of VMEM (works on v5e/v6e 128 MiB and v7x 64 MiB).
    per_buffer_budget = 8 * 1024 * 1024  # x4 buffers -> ~32 MiB pipelined
    tile_elems = max(per_buffer_budget // itemsize, tile_f)
    tile_n = max(sublane_min, (tile_elems // tile_f) // sublane_min * sublane_min)
    if tile_n >= rows:
        tile_n = rows  # full-dim block is always a legal block shape

    grid = (pl.cdiv(rows, tile_n), pl.cdiv(width, tile_f))

    cost = pl.CostEstimate(
        flops=rows * width,
        transcendentals=0,
        bytes_accessed=(2 * rows * width + width) * itemsize,
    )

    out2 = pl.pallas_call(
        _dotproduct_kernel,
        out_shape=jax.ShapeDtypeStruct((rows, width), x.dtype),
        grid_spec=pltpu.PrefetchScalarGridSpec(
            num_scalar_prefetch=0,
            grid=grid,
            in_specs=[
                pl.BlockSpec((tile_n, tile_f), lambda i, j: (i, j)),  # input tile
                pl.BlockSpec((1, tile_f), lambda i, j: (0, j)),       # weight (VMEM-resident)
            ],
            out_specs=pl.BlockSpec((tile_n, tile_f), lambda i, j: (i, j)),
        ),
        compiler_params=pltpu.CompilerParams(
            dimension_semantics=("parallel", "parallel"),
            vmem_limit_bytes=48 * 1024 * 1024,
        ),
        cost_estimate=cost,
    )(x2, w2)

    return out2.reshape(orig_shape)


def init_weight(key: jax.Array, in_features: int) -> jax.Array:
    """Deterministic init matching reset_parameters: uniform(-stdv, stdv)."""
    stdv = 1.0 / math.sqrt(in_features)
    return jax.random.uniform(
        key, (1, in_features), dtype=jnp.float32, minval=-stdv, maxval=stdv
    )


if __name__ == "__main__":
    key = jax.random.PRNGKey(0)
    k_x, k_w = jax.random.split(key)

    # Small shapes consistent with the module: 8 rows, in_features=32.
    N, F = 8, 32
    x = jax.random.normal(k_x, (N, F), dtype=jnp.float32)
    w = init_weight(k_w, F)

    out = jax.block_until_ready(dotproduct_forward(x, w))
    ref = x * w
    assert out.shape == (N, F)
    assert jnp.allclose(out, ref, atol=1e-6, rtol=1e-6)

    # Secondary sanity check: F >= 128 path (no packing), non-multiple row count.
    x2 = jax.random.normal(k_x, (520, 256), dtype=jnp.float32)
    w2 = init_weight(k_w, 256)
    out2 = jax.block_until_ready(dotproduct_forward(x2, w2))
    assert jnp.allclose(out2, x2 * w2, atol=1e-6, rtol=1e-6)

    print("KERNEL_OK")
</pallas_src>

<mosaic_0001>
module attributes {stable_mosaic.version = 11 : i64} {
  func.func @_dotproduct_kernel(%arg0: i32, %arg1: i32, %arg2: memref<1x256xf32, #tpu.memory_space<vmem>>, %arg3: memref<1x256xf32, #tpu.memory_space<vmem>>, %arg4: memref<1x256xf32, #tpu.memory_space<vmem>>) attributes {dimension_semantics = [#tpu.dimension_semantics<parallel>, #tpu.dimension_semantics<parallel>], iteration_bounds = array<i64: 1, 1>, scalar_prefetch = 0 : i64, scratch_operands = 0 : i64, tpu.core_type = #tpu.core_type<tc>, window_params = [{transform_indices = @transform_0, window_bounds = array<i64: 1, 256>}, {transform_indices = @transform_1, window_bounds = array<i64: 1, 256>}, {transform_indices = @transform_2, window_bounds = array<i64: 1, 256>}]} {
    %c0 = arith.constant 0 : index
    %c0_0 = arith.constant 0 : index
    %0 = vector.load %arg2[%c0, %c0_0] : memref<1x256xf32, #tpu.memory_space<vmem>>, vector<1x256xf32>
    %c0_1 = arith.constant 0 : index
    %c0_2 = arith.constant 0 : index
    %1 = vector.load %arg3[%c0_1, %c0_2] : memref<1x256xf32, #tpu.memory_space<vmem>>, vector<1x256xf32>
    %2 = arith.mulf %0, %1 : vector<1x256xf32>
    %c0_3 = arith.constant 0 : index
    %c0_4 = arith.constant 0 : index
    %3 = vector.load %arg4[%c0_3, %c0_4] : memref<1x256xf32, #tpu.memory_space<vmem>>, vector<1x256xf32>
    tpu.vector_store %arg4[%c0_3, %c0_4], %2 {strides = array<i32>} : memref<1x256xf32, #tpu.memory_space<vmem>>, vector<1x256xf32>,
    return
  }
  func.func @transform_0(%arg0: i32, %arg1: i32) -> (i32, i32) {
    %c0_i32 = arith.constant 0 : i32
    return %arg0, %arg1 : i32, i32
  }
  func.func @transform_1(%arg0: i32, %arg1: i32) -> (i32, i32) {
    %c0_i32 = arith.constant 0 : i32
    %c0_i32_0 = arith.constant 0 : i32
    return %c0_i32, %arg1 : i32, i32
  }
  func.func @transform_2(%arg0: i32, %arg1: i32) -> (i32, i32) {
    %c0_i32 = arith.constant 0 : i32
    return %arg0, %arg1 : i32, i32
  }
}

</mosaic_0001>

<llo_original>
// kernel: tpu_custom_call.1
$region0: #{tpu_custom_call.1}
  #allocation0 [shape = 'u32[]', space=smem, size = 0x4, offset = 0x4, fixed_abs, tag = 'smem constant byte address 0x4 - core index']
  #allocation1 [shape = 'u32[144,128]{1,0:T(1,128)}', space=vmem, size = 0x12000, scoped, tag = 'internal scratch']
  %s0 = inlined_call_operand.hbm [shape: f32[1,256], index: 0, kind: input, shape index: {}]
  %s1 = inlined_call_operand.vmem [shape: f32[1,256], index: 1, kind: input, shape index: {}]
  %s2 = inlined_call_operand.hbm [shape: f32[1,256], index: 2, kind: output, shape index: {}]
  %s3 = sld [smem:[#allocation0]]
  $region22: #{tpu_custom_call.1} parent=0
    _
  %s5 = ssub.s32 1, %s3
  %s6 = scalar_select 0, %s5, %s3
  $region1: #{tpu_custom_call.1} parent=0
    #allocation2 [shape = 'u8[1024]{0}', space=vmem, size = 0x400, scoped, tag = 'input window, operand 0, single buffered']
    #allocation3 [shape = 's32[1]{0}', space=sflag, size = 0x4, scoped, tag = 'scoped memory for tpu_custom_call.1']
    #allocation4 [shape = 's32[1]{0}', space=sflag, size = 0x4, scoped, tag = 'scoped memory for tpu_custom_call.1']
    #allocation5 [shape = 'u8[1024]{0}', space=vmem, size = 0x400, scoped, tag = 'output window, operand 0, single buffered']
    %7 = vsyncpa [#allocation3], 0
    %8 = vsyncpa [#allocation4], 0
    // Predicated region
    $region2: #{tpu_custom_call.1} parent=1 // pred_check
      _
    $region3: #{tpu_custom_call.1} parent=1 // pred_check_branch
      %10 = sbr.rel (0) target = $region5
    $region4: #{tpu_custom_call.1} parent=1 // pred_region
      %s12 = ssub.s32 32, 32
      %13 = vsyncadd [#allocation3], %s12
      %s15 = sshll.u32 [#allocation2], 4
      %s16 = int_to_ptr.vmem [resolvable:$true] %s15
      %18 = dma.hbm_to_vmem [thread:$0]  %s0, 32, %s16, [#allocation3]
    $region5: #{tpu_custom_call.1} parent=1 // pred_fallthru
      _
    // Predicated region
    $region6: #{tpu_custom_call.1} parent=1 // pred_check
      _
    $region7: #{tpu_custom_call.1} parent=1 // pred_check_branch
      %20 = sbr.rel (0) target = $region9
    $region8: #{tpu_custom_call.1} parent=1 // pred_region
      _
    $region9: #{tpu_custom_call.1} parent=1 // pred_fallthru
      _
    // Predicated region
    $region10: #{tpu_custom_call.1} parent=1 // pred_check
      _
    $region11: #{tpu_custom_call.1} parent=1 // pred_check_branch
      %22 = sbr.rel (0) target = $region13
    $region12: #{tpu_custom_call.1} parent=1 // pred_region
      %23 = dma.done [#allocation3], 32
    $region13: #{tpu_custom_call.1} parent=1 // pred_fallthru
      _
    %v24 = vld [vmem:[#allocation2] sm:$0x3]
    %v25 = vld [vmem:[%s1] sm:$0x3]
    %v26 = vmul.f32 %v24, %v25
    %v27 = vlaneseq
    %vm28 = vcmp.ge.s32.totalorder %v27, 0
    %vm29 = vcmp.lt.s32.totalorder %v27, 256
    %vm30 = vmand %vm28, %vm29
    %31 = vst.msk [vmem:[#allocation5] sm:$0x3] %vm30, %v26
    // Predicated region
    $region14: #{tpu_custom_call.1} parent=1 // pred_check
      _
    $region15: #{tpu_custom_call.1} parent=1 // pred_check_branch
      %33 = sbr.rel (0) target = $region17
    $region16: #{tpu_custom_call.1} parent=1 // pred_region
      %s35 = ssub.s32 32, 32
      %36 = vsyncadd [#allocation4], %s35
      %s38 = sshll.u32 [#allocation5], 4
      %s39 = int_to_ptr.vmem [resolvable:$true] %s38
      %41 = dma.vmem_to_hbm [thread:$0]  %s39, 32, %s2, [#allocation4]
    $region17: #{tpu_custom_call.1} parent=1 // pred_fallthru
      _
    // Predicated region
    $region18: #{tpu_custom_call.1} parent=1 // pred_check
      _
    $region19: #{tpu_custom_call.1} parent=1 // pred_check_branch
      %43 = sbr.rel (0) target = $region21
    $region20: #{tpu_custom_call.1} parent=1 // pred_region
      %44 = dma.done [#allocation4], 32
    $region21: #{tpu_custom_call.1} parent=1 // pred_fallthru
      _
    %45 = vsyncpa [#allocation3], 1
    %46 = vsyncpa [#allocation4], 1

</llo_original>
